<compile_context>
chip_gen: v6e
topology: v6e:2x2x1
jax: 0.10.0
libtpu: 0.0.40
codegen_flags: <defaults>
</compile_context>

<pallas_src>
import jax
import jax.numpy as jnp
from jax.experimental import pallas as pl
from jax.experimental.pallas import tpu as pltpu


def _lstm_recurrence_kernel(xg_ref, whh_ref, out_ref, hn_ref, cn_ref):
    """LSTM recurrence over the full sequence in one kernel invocation.

    xg_ref : (T, B, 4H)  precomputed x_t @ W_ih^T + (b_ih + b_hh), time-major
    whh_ref: (H, 4H)     recurrent weights, pre-transposed
    out_ref: (T, B, H)   per-timestep hidden states (time-major)
    hn_ref : (B, H)      final hidden state
    cn_ref : (B, H)      final cell state
    """
    T, B, _ = xg_ref.shape
    H = whh_ref.shape[0]

    whh = whh_ref[...]                      # keep recurrent weights resident
    h = jnp.zeros((B, H), jnp.float32)
    c = jnp.zeros((B, H), jnp.float32)

    # T is small and static at trace time -> fully unrolled loop with static
    # indices (full LLO scheduler visibility, no dynamic-slice overhead).
    # TODO(synk): switch to lax.fori_loop(..., unroll=...) for very long T.
    for t in range(T):
        gates = xg_ref[t] + jnp.dot(h, whh, preferred_element_type=jnp.float32)
        i_g = jax.nn.sigmoid(gates[:, 0 * H:1 * H])
        f_g = jax.nn.sigmoid(gates[:, 1 * H:2 * H])
        g_g = jnp.tanh(gates[:, 2 * H:3 * H])
        o_g = jax.nn.sigmoid(gates[:, 3 * H:4 * H])
        c = f_g * c + i_g * g_g
        h = o_g * jnp.tanh(c)
        out_ref[t] = h

    hn_ref[...] = h
    cn_ref[...] = c


def lstm_model_forward(x, params):
    """x: [B, T, D] float32 (batch_first). Returns (y_out, y_pred, out, hn, cn)."""
    if x.ndim == 2:                          # mirror the PyTorch view(...,1) path
        x = x[..., None]
    B, T, D = x.shape
    H = params["w_hh_t"].shape[0]

    # Phase 1 (wrapper, one big XLA matmul): input projection for all timesteps.
    xg = (x.reshape(B * T, D) @ params["w_ih_t"] + params["b_gates"])
    xg_tm = jnp.transpose(xg.reshape(B, T, 4 * H), (1, 0, 2))   # (T, B, 4H)

    # Phase 2 (Pallas, single invocation): the serial LSTM recurrence.
    out_tm, hn, cn = pl.pallas_call(
        _lstm_recurrence_kernel,
        out_shape=(
            jax.ShapeDtypeStruct((T, B, H), jnp.float32),   # out (time-major)
            jax.ShapeDtypeStruct((B, H), jnp.float32),      # hn[-1]
            jax.ShapeDtypeStruct((B, H), jnp.float32),      # cn[-1]
        ),
        grid=(1,),
        in_specs=[
            pl.BlockSpec((T, B, 4 * H), lambda i: (0, 0, 0)),   # xg (whole seq)
            pl.BlockSpec((H, 4 * H), lambda i: (0, 0)),         # W_hh^T
        ],
        out_specs=(
            pl.BlockSpec((T, B, H), lambda i: (0, 0, 0)),
            pl.BlockSpec((B, H), lambda i: (0, 0)),
            pl.BlockSpec((B, H), lambda i: (0, 0)),
        ),
        compiler_params=pltpu.CompilerParams(
            dimension_semantics=("arbitrary",)),
    )(xg_tm, params["w_hh_t"])

    out = jnp.transpose(out_tm, (1, 0, 2))          # back to [B, T, H]

    # Phase 3 (wrapper): output head used exactly once on hn.
    y_out = hn @ params["w_out_t"] + params["b_out"]
    y_pred = jax.nn.softmax(y_out, axis=1)          # exp(log_softmax) == softmax

    return y_out, y_pred, out, hn[None, ...], cn[None, ...]


def init_params(key, input_dim, hidden_dim, output_dim):
    """Deterministic parameter init matching PyTorch shapes (gate order i,f,g,o)."""
    k = jax.random.split(key, 6)
    s_lstm = 1.0 / jnp.sqrt(hidden_dim)
    s_lin = 1.0 / jnp.sqrt(hidden_dim)
    w_ih = jax.random.uniform(k[0], (4 * hidden_dim, input_dim), jnp.float32,
                              -s_lstm, s_lstm)
    w_hh = jax.random.uniform(k[1], (4 * hidden_dim, hidden_dim), jnp.float32,
                              -s_lstm, s_lstm)
    b_ih = jax.random.uniform(k[2], (4 * hidden_dim,), jnp.float32, -s_lstm, s_lstm)
    b_hh = jax.random.uniform(k[3], (4 * hidden_dim,), jnp.float32, -s_lstm, s_lstm)
    w_out = jax.random.uniform(k[4], (output_dim, hidden_dim), jnp.float32,
                               -s_lin, s_lin)
    b_out = jax.random.uniform(k[5], (output_dim,), jnp.float32, -s_lin, s_lin)
    return {
        "w_ih_t": w_ih.T,                           # (D, 4H)
        "w_hh_t": w_hh.T,                           # (H, 4H)
        "b_gates": (b_ih + b_hh)[None, :],          # (1, 4H)
        "w_out_t": w_out.T,                         # (H, O)
        "b_out": b_out[None, :],                    # (1, O)
    }


def _reference_forward(x, params):
    """Pure-JAX reference of the same LSTM forward for verification."""
    B, T, D = x.shape
    H = params["w_hh_t"].shape[0]
    h = jnp.zeros((B, H), jnp.float32)
    c = jnp.zeros((B, H), jnp.float32)
    outs = []
    for t in range(T):
        gates = (x[:, t, :] @ params["w_ih_t"] + h @ params["w_hh_t"]
                 + params["b_gates"])
        i_g = jax.nn.sigmoid(gates[:, 0 * H:1 * H])
        f_g = jax.nn.sigmoid(gates[:, 1 * H:2 * H])
        g_g = jnp.tanh(gates[:, 2 * H:3 * H])
        o_g = jax.nn.sigmoid(gates[:, 3 * H:4 * H])
        c = f_g * c + i_g * g_g
        h = o_g * jnp.tanh(c)
        outs.append(h)
    out = jnp.stack(outs, axis=1)
    y_out = h @ params["w_out_t"] + params["b_out"]
    y_pred = jax.nn.softmax(y_out, axis=1)
    return y_out, y_pred, out, h[None], c[None]


if __name__ == "__main__":
    # Small shapes consistent with the module: batch=2, seq=8, features=4, hidden=32, output=2.
    B, T, D, H, O = 2, 8, 4, 32, 2
    key = jax.random.PRNGKey(0)
    k_x, k_p = jax.random.split(key)
    x = jax.random.normal(k_x, (B, T, D), jnp.float32)
    params = init_params(k_p, D, H, O)

    fwd = jax.jit(lstm_model_forward)
    y_out, y_pred, out, hn, cn = fwd(x, params)
    jax.block_until_ready((y_out, y_pred, out, hn, cn))

    # Verify against pure-JAX reference.
    r_y_out, r_y_pred, r_out, r_hn, r_cn = _reference_forward(x, params)
    assert jnp.allclose(y_out, r_y_out, atol=1e-4), "y_out mismatch"
    assert jnp.allclose(y_pred, r_y_pred, atol=1e-4), "y_pred mismatch"
    assert jnp.allclose(out, r_out, atol=1e-4), "out mismatch"
    assert jnp.allclose(hn, r_hn, atol=1e-4), "hn mismatch"
    assert jnp.allclose(cn, r_cn, atol=1e-4), "cn mismatch"

    print("KERNEL_OK")
</pallas_src>

<mosaic_0001>
module attributes {stable_mosaic.version = 11 : i64} {
  func.func @_lstm_recurrence_kernel(%arg0: i32, %arg1: memref<8x2x128xf32, #tpu.memory_space<vmem>>, %arg2: memref<32x128xf32, #tpu.memory_space<vmem>>, %arg3: memref<8x2x32xf32, #tpu.memory_space<vmem>>, %arg4: memref<2x32xf32, #tpu.memory_space<vmem>>, %arg5: memref<2x32xf32, #tpu.memory_space<vmem>>) attributes {dimension_semantics = [#tpu.dimension_semantics<arbitrary>], iteration_bounds = array<i64: 1>, scalar_prefetch = 0 : i64, scratch_operands = 0 : i64, tpu.core_type = #tpu.core_type<tc>, window_params = [{pipeline_mode = #tpu.pipeline_mode<synchronous>, transform_indices = @transform_0, window_bounds = array<i64: 8, 2, 128>}, {pipeline_mode = #tpu.pipeline_mode<synchronous>, transform_indices = @transform_1, window_bounds = array<i64: 32, 128>}, {pipeline_mode = #tpu.pipeline_mode<synchronous>, transform_indices = @transform_2, window_bounds = array<i64: 8, 2, 32>}, {pipeline_mode = #tpu.pipeline_mode<synchronous>, transform_indices = @transform_3, window_bounds = array<i64: 2, 32>}, {pipeline_mode = #tpu.pipeline_mode<synchronous>, transform_indices = @transform_4, window_bounds = array<i64: 2, 32>}]} {
    %c0 = arith.constant 0 : index
    %c0_0 = arith.constant 0 : index
    %0 = vector.load %arg2[%c0, %c0_0] : memref<32x128xf32, #tpu.memory_space<vmem>>, vector<32x128xf32>
    %cst = arith.constant 0.000000e+00 : f32
    %1 = vector.broadcast %cst : f32 to vector<2x32xf32>
    %cst_1 = arith.constant 0.000000e+00 : f32
    %2 = vector.broadcast %cst_1 : f32 to vector<2x32xf32>
    %c0_2 = arith.constant 0 : index
    %c0_3 = arith.constant 0 : index
    %c0_4 = arith.constant 0 : index
    %3 = vector.load %arg1[%c0_2, %c0_3, %c0_4] : memref<8x2x128xf32, #tpu.memory_space<vmem>>, vector<1x2x128xf32>
    %4 = vector.shape_cast %3 : vector<1x2x128xf32> to vector<2x128xf32>
    %cst_5 = arith.constant dense<0.000000e+00> : vector<2x128xf32>
    %5 = tpu.matmul %1, %0, %cst_5 {dimension_numbers = #tpu.dot_dimension_numbers<[1], [0], [0], [1], [0, 0, 1, 1], [], []>} : vector<2x32xf32>, vector<32x128xf32>, vector<2x128xf32> -> vector<2x128xf32>
    %6 = arith.addf %4, %5 : vector<2x128xf32>
    %7 = vector.extract_strided_slice %6 {offsets = [0, 0], sizes = [2, 32], strides = [1, 1]} : vector<2x128xf32> to vector<2x32xf32>
    %8 = arith.negf %7 : vector<2x32xf32>
    %9 = math.exp %8 : vector<2x32xf32>
    %cst_6 = arith.constant 1.000000e+00 : f32
    %10 = vector.broadcast %cst_6 : f32 to vector<2x32xf32>
    %11 = arith.addf %10, %9 : vector<2x32xf32>
    %12 = arith.divf %10, %11 : vector<2x32xf32>
    %13 = vector.extract_strided_slice %6 {offsets = [0, 32], sizes = [2, 32], strides = [1, 1]} : vector<2x128xf32> to vector<2x32xf32>
    %14 = arith.negf %13 : vector<2x32xf32>
    %15 = math.exp %14 : vector<2x32xf32>
    %cst_7 = arith.constant 1.000000e+00 : f32
    %16 = vector.broadcast %cst_7 : f32 to vector<2x32xf32>
    %17 = arith.addf %16, %15 : vector<2x32xf32>
    %18 = arith.divf %16, %17 : vector<2x32xf32>
    %19 = vector.extract_strided_slice %6 {offsets = [0, 64], sizes = [2, 32], strides = [1, 1]} : vector<2x128xf32> to vector<2x32xf32>
    %20 = math.tanh %19 : vector<2x32xf32>
    %21 = vector.extract_strided_slice %6 {offsets = [0, 96], sizes = [2, 32], strides = [1, 1]} : vector<2x128xf32> to vector<2x32xf32>
    %22 = arith.negf %21 : vector<2x32xf32>
    %23 = math.exp %22 : vector<2x32xf32>
    %cst_8 = arith.constant 1.000000e+00 : f32
    %24 = vector.broadcast %cst_8 : f32 to vector<2x32xf32>
    %25 = arith.addf %24, %23 : vector<2x32xf32>
    %26 = arith.divf %24, %25 : vector<2x32xf32>
    %27 = arith.mulf %18, %2 : vector<2x32xf32>
    %28 = arith.mulf %12, %20 : vector<2x32xf32>
    %29 = arith.addf %27, %28 : vector<2x32xf32>
    %30 = math.tanh %29 : vector<2x32xf32>
    %31 = arith.mulf %26, %30 : vector<2x32xf32>
    %c0_9 = arith.constant 0 : index
    %c0_10 = arith.constant 0 : index
    %c0_11 = arith.constant 0 : index
    %32 = vector.load %arg3[%c0_9, %c0_10, %c0_11] : memref<8x2x32xf32, #tpu.memory_space<vmem>>, vector<1x2x32xf32>
    %33 = vector.shape_cast %32 : vector<1x2x32xf32> to vector<2x32xf32>
    %34 = vector.shape_cast %31 : vector<2x32xf32> to vector<1x2x32xf32>
    tpu.vector_store %arg3[%c0_9, %c0_10, %c0_11], %34 {strides = array<i32>} : memref<8x2x32xf32, #tpu.memory_space<vmem>>, vector<1x2x32xf32>,
    %c1 = arith.constant 1 : index
    %c0_12 = arith.constant 0 : index
    %c0_13 = arith.constant 0 : index
    %35 = vector.load %arg1[%c1, %c0_12, %c0_13] : memref<8x2x128xf32, #tpu.memory_space<vmem>>, vector<1x2x128xf32>
    %36 = vector.shape_cast %35 : vector<1x2x128xf32> to vector<2x128xf32>
    %cst_14 = arith.constant dense<0.000000e+00> : vector<2x128xf32>
    %37 = tpu.matmul %31, %0, %cst_14 {dimension_numbers = #tpu.dot_dimension_numbers<[1], [0], [0], [1], [0, 0, 1, 1], [], []>} : vector<2x32xf32>, vector<32x128xf32>, vector<2x128xf32> -> vector<2x128xf32>
    %38 = arith.addf %36, %37 : vector<2x128xf32>
    %39 = vector.extract_strided_slice %38 {offsets = [0, 0], sizes = [2, 32], strides = [1, 1]} : vector<2x128xf32> to vector<2x32xf32>
    %40 = arith.negf %39 : vector<2x32xf32>
    %41 = math.exp %40 : vector<2x32xf32>
    %cst_15 = arith.constant 1.000000e+00 : f32
    %42 = vector.broadcast %cst_15 : f32 to vector<2x32xf32>
    %43 = arith.addf %42, %41 : vector<2x32xf32>
    %44 = arith.divf %42, %43 : vector<2x32xf32>
    %45 = vector.extract_strided_slice %38 {offsets = [0, 32], sizes = [2, 32], strides = [1, 1]} : vector<2x128xf32> to vector<2x32xf32>
    %46 = arith.negf %45 : vector<2x32xf32>
    %47 = math.exp %46 : vector<2x32xf32>
    %cst_16 = arith.constant 1.000000e+00 : f32
    %48 = vector.broadcast %cst_16 : f32 to vector<2x32xf32>
    %49 = arith.addf %48, %47 : vector<2x32xf32>
    %50 = arith.divf %48, %49 : vector<2x32xf32>
    %51 = vector.extract_strided_slice %38 {offsets = [0, 64], sizes = [2, 32], strides = [1, 1]} : vector<2x128xf32> to vector<2x32xf32>
    %52 = math.tanh %51 : vector<2x32xf32>
    %53 = vector.extract_strided_slice %38 {offsets = [0, 96], sizes = [2, 32], strides = [1, 1]} : vector<2x128xf32> to vector<2x32xf32>
    %54 = arith.negf %53 : vector<2x32xf32>
    %55 = math.exp %54 : vector<2x32xf32>
    %cst_17 = arith.constant 1.000000e+00 : f32
    %56 = vector.broadcast %cst_17 : f32 to vector<2x32xf32>
    %57 = arith.addf %56, %55 : vector<2x32xf32>
    %58 = arith.divf %56, %57 : vector<2x32xf32>
    %59 = arith.mulf %50, %29 : vector<2x32xf32>
    %60 = arith.mulf %44, %52 : vector<2x32xf32>
    %61 = arith.addf %59, %60 : vector<2x32xf32>
    %62 = math.tanh %61 : vector<2x32xf32>
    %63 = arith.mulf %58, %62 : vector<2x32xf32>
    %c1_18 = arith.constant 1 : index
    %c0_19 = arith.constant 0 : index
    %c0_20 = arith.constant 0 : index
    %64 = vector.load %arg3[%c1_18, %c0_19, %c0_20] : memref<8x2x32xf32, #tpu.memory_space<vmem>>, vector<1x2x32xf32>
    %65 = vector.shape_cast %64 : vector<1x2x32xf32> to vector<2x32xf32>
    %66 = vector.shape_cast %63 : vector<2x32xf32> to vector<1x2x32xf32>
    tpu.vector_store %arg3[%c1_18, %c0_19, %c0_20], %66 {strides = array<i32>} : memref<8x2x32xf32, #tpu.memory_space<vmem>>, vector<1x2x32xf32>,
    %c2 = arith.constant 2 : index
    %c0_21 = arith.constant 0 : index
    %c0_22 = arith.constant 0 : index
    %67 = vector.load %arg1[%c2, %c0_21, %c0_22] : memref<8x2x128xf32, #tpu.memory_space<vmem>>, vector<1x2x128xf32>
    %68 = vector.shape_cast %67 : vector<1x2x128xf32> to vector<2x128xf32>
    %cst_23 = arith.constant dense<0.000000e+00> : vector<2x128xf32>
    %69 = tpu.matmul %63, %0, %cst_23 {dimension_numbers = #tpu.dot_dimension_numbers<[1], [0], [0], [1], [0, 0, 1, 1], [], []>} : vector<2x32xf32>, vector<32x128xf32>, vector<2x128xf32> -> vector<2x128xf32>
    %70 = arith.addf %68, %69 : vector<2x128xf32>
    %71 = vector.extract_strided_slice %70 {offsets = [0, 0], sizes = [2, 32], strides = [1, 1]} : vector<2x128xf32> to vector<2x32xf32>
    %72 = arith.negf %71 : vector<2x32xf32>
    %73 = math.exp %72 : vector<2x32xf32>
    %cst_24 = arith.constant 1.000000e+00 : f32
    %74 = vector.broadcast %cst_24 : f32 to vector<2x32xf32>
    %75 = arith.addf %74, %73 : vector<2x32xf32>
    %76 = arith.divf %74, %75 : vector<2x32xf32>
    %77 = vector.extract_strided_slice %70 {offsets = [0, 32], sizes = [2, 32], strides = [1, 1]} : vector<2x128xf32> to vector<2x32xf32>
    %78 = arith.negf %77 : vector<2x32xf32>
    %79 = math.exp %78 : vector<2x32xf32>
    %cst_25 = arith.constant 1.000000e+00 : f32
    %80 = vector.broadcast %cst_25 : f32 to vector<2x32xf32>
    %81 = arith.addf %80, %79 : vector<2x32xf32>
    %82 = arith.divf %80, %81 : vector<2x32xf32>
    %83 = vector.extract_strided_slice %70 {offsets = [0, 64], sizes = [2, 32], strides = [1, 1]} : vector<2x128xf32> to vector<2x32xf32>
    %84 = math.tanh %83 : vector<2x32xf32>
    %85 = vector.extract_strided_slice %70 {offsets = [0, 96], sizes = [2, 32], strides = [1, 1]} : vector<2x128xf32> to vector<2x32xf32>
    %86 = arith.negf %85 : vector<2x32xf32>
    %87 = math.exp %86 : vector<2x32xf32>
    %cst_26 = arith.constant 1.000000e+00 : f32
    %88 = vector.broadcast %cst_26 : f32 to vector<2x32xf32>
    %89 = arith.addf %88, %87 : vector<2x32xf32>
    %90 = arith.divf %88, %89 : vector<2x32xf32>
    %91 = arith.mulf %82, %61 : vector<2x32xf32>
    %92 = arith.mulf %76, %84 : vector<2x32xf32>
    %93 = arith.addf %91, %92 : vector<2x32xf32>
    %94 = math.tanh %93 : vector<2x32xf32>
    %95 = arith.mulf %90, %94 : vector<2x32xf32>
    %c2_27 = arith.constant 2 : index
    %c0_28 = arith.constant 0 : index
    %c0_29 = arith.constant 0 : index
    %96 = vector.load %arg3[%c2_27, %c0_28, %c0_29] : memref<8x2x32xf32, #tpu.memory_space<vmem>>, vector<1x2x32xf32>
    %97 = vector.shape_cast %96 : vector<1x2x32xf32> to vector<2x32xf32>
    %98 = vector.shape_cast %95 : vector<2x32xf32> to vector<1x2x32xf32>
    tpu.vector_store %arg3[%c2_27, %c0_28, %c0_29], %98 {strides = array<i32>} : memref<8x2x32xf32, #tpu.memory_space<vmem>>, vector<1x2x32xf32>,
    %c3 = arith.constant 3 : index
    %c0_30 = arith.constant 0 : index
    %c0_31 = arith.constant 0 : index
    %99 = vector.load %arg1[%c3, %c0_30, %c0_31] : memref<8x2x128xf32, #tpu.memory_space<vmem>>, vector<1x2x128xf32>
    %100 = vector.shape_cast %99 : vector<1x2x128xf32> to vector<2x128xf32>
    %cst_32 = arith.constant dense<0.000000e+00> : vector<2x128xf32>
    %101 = tpu.matmul %95, %0, %cst_32 {dimension_numbers = #tpu.dot_dimension_numbers<[1], [0], [0], [1], [0, 0, 1, 1], [], []>} : vector<2x32xf32>, vector<32x128xf32>, vector<2x128xf32> -> vector<2x128xf32>
    %102 = arith.addf %100, %101 : vector<2x128xf32>
    %103 = vector.extract_strided_slice %102 {offsets = [0, 0], sizes = [2, 32], strides = [1, 1]} : vector<2x128xf32> to vector<2x32xf32>
    %104 = arith.negf %103 : vector<2x32xf32>
    %105 = math.exp %104 : vector<2x32xf32>
    %cst_33 = arith.constant 1.000000e+00 : f32
    %106 = vector.broadcast %cst_33 : f32 to vector<2x32xf32>
    %107 = arith.addf %106, %105 : vector<2x32xf32>
    %108 = arith.divf %106, %107 : vector<2x32xf32>
    %109 = vector.extract_strided_slice %102 {offsets = [0, 32], sizes = [2, 32], strides = [1, 1]} : vector<2x128xf32> to vector<2x32xf32>
    %110 = arith.negf %109 : vector<2x32xf32>
    %111 = math.exp %110 : vector<2x32xf32>
    %cst_34 = arith.constant 1.000000e+00 : f32
    %112 = vector.broadcast %cst_34 : f32 to vector<2x32xf32>
    %113 = arith.addf %112, %111 : vector<2x32xf32>
    %114 = arith.divf %112, %113 : vector<2x32xf32>
    %115 = vector.extract_strided_slice %102 {offsets = [0, 64], sizes = [2, 32], strides = [1, 1]} : vector<2x128xf32> to vector<2x32xf32>
    %116 = math.tanh %115 : vector<2x32xf32>
    %117 = vector.extract_strided_slice %102 {offsets = [0, 96], sizes = [2, 32], strides = [1, 1]} : vector<2x128xf32> to vector<2x32xf32>
    %118 = arith.negf %117 : vector<2x32xf32>
    %119 = math.exp %118 : vector<2x32xf32>
    %cst_35 = arith.constant 1.000000e+00 : f32
    %120 = vector.broadcast %cst_35 : f32 to vector<2x32xf32>
    %121 = arith.addf %120, %119 : vector<2x32xf32>
    %122 = arith.divf %120, %121 : vector<2x32xf32>
    %123 = arith.mulf %114, %93 : vector<2x32xf32>
    %124 = arith.mulf %108, %116 : vector<2x32xf32>
    %125 = arith.addf %123, %124 : vector<2x32xf32>
    %126 = math.tanh %125 : vector<2x32xf32>
    %127 = arith.mulf %122, %126 : vector<2x32xf32>
    %c3_36 = arith.constant 3 : index
    %c0_37 = arith.constant 0 : index
    %c0_38 = arith.constant 0 : index
    %128 = vector.load %arg3[%c3_36, %c0_37, %c0_38] : memref<8x2x32xf32, #tpu.memory_space<vmem>>, vector<1x2x32xf32>
    %129 = vector.shape_cast %128 : vector<1x2x32xf32> to vector<2x32xf32>
    %130 = vector.shape_cast %127 : vector<2x32xf32> to vector<1x2x32xf32>
    tpu.vector_store %arg3[%c3_36, %c0_37, %c0_38], %130 {strides = array<i32>} : memref<8x2x32xf32, #tpu.memory_space<vmem>>, vector<1x2x32xf32>,
    %c4 = arith.constant 4 : index
    %c0_39 = arith.constant 0 : index
    %c0_40 = arith.constant 0 : index
    %131 = vector.load %arg1[%c4, %c0_39, %c0_40] : memref<8x2x128xf32, #tpu.memory_space<vmem>>, vector<1x2x128xf32>
    %132 = vector.shape_cast %131 : vector<1x2x128xf32> to vector<2x128xf32>
    %cst_41 = arith.constant dense<0.000000e+00> : vector<2x128xf32>
    %133 = tpu.matmul %127, %0, %cst_41 {dimension_numbers = #tpu.dot_dimension_numbers<[1], [0], [0], [1], [0, 0, 1, 1], [], []>} : vector<2x32xf32>, vector<32x128xf32>, vector<2x128xf32> -> vector<2x128xf32>
    %134 = arith.addf %132, %133 : vector<2x128xf32>
    %135 = vector.extract_strided_slice %134 {offsets = [0, 0], sizes = [2, 32], strides = [1, 1]} : vector<2x128xf32> to vector<2x32xf32>
    %136 = arith.negf %135 : vector<2x32xf32>
    %137 = math.exp %136 : vector<2x32xf32>
    %cst_42 = arith.constant 1.000000e+00 : f32
    %138 = vector.broadcast %cst_42 : f32 to vector<2x32xf32>
    %139 = arith.addf %138, %137 : vector<2x32xf32>
    %140 = arith.divf %138, %139 : vector<2x32xf32>
    %141 = vector.extract_strided_slice %134 {offsets = [0, 32], sizes = [2, 32], strides = [1, 1]} : vector<2x128xf32> to vector<2x32xf32>
    %142 = arith.negf %141 : vector<2x32xf32>
    %143 = math.exp %142 : vector<2x32xf32>
    %cst_43 = arith.constant 1.000000e+00 : f32
    %144 = vector.broadcast %cst_43 : f32 to vector<2x32xf32>
    %145 = arith.addf %144, %143 : vector<2x32xf32>
    %146 = arith.divf %144, %145 : vector<2x32xf32>
    %147 = vector.extract_strided_slice %134 {offsets = [0, 64], sizes = [2, 32], strides = [1, 1]} : vector<2x128xf32> to vector<2x32xf32>
    %148 = math.tanh %147 : vector<2x32xf32>
    %149 = vector.extract_strided_slice %134 {offsets = [0, 96], sizes = [2, 32], strides = [1, 1]} : vector<2x128xf32> to vector<2x32xf32>
    %150 = arith.negf %149 : vector<2x32xf32>
    %151 = math.exp %150 : vector<2x32xf32>
    %cst_44 = arith.constant 1.000000e+00 : f32
    %152 = vector.broadcast %cst_44 : f32 to vector<2x32xf32>
    %153 = arith.addf %152, %151 : vector<2x32xf32>
    %154 = arith.divf %152, %153 : vector<2x32xf32>
    %155 = arith.mulf %146, %125 : vector<2x32xf32>
    %156 = arith.mulf %140, %148 : vector<2x32xf32>
    %157 = arith.addf %155, %156 : vector<2x32xf32>
    %158 = math.tanh %157 : vector<2x32xf32>
    %159 = arith.mulf %154, %158 : vector<2x32xf32>
    %c4_45 = arith.constant 4 : index
    %c0_46 = arith.constant 0 : index
    %c0_47 = arith.constant 0 : index
    %160 = vector.load %arg3[%c4_45, %c0_46, %c0_47] : memref<8x2x32xf32, #tpu.memory_space<vmem>>, vector<1x2x32xf32>
    %161 = vector.shape_cast %160 : vector<1x2x32xf32> to vector<2x32xf32>
    %162 = vector.shape_cast %159 : vector<2x32xf32> to vector<1x2x32xf32>
    tpu.vector_store %arg3[%c4_45, %c0_46, %c0_47], %162 {strides = array<i32>} : memref<8x2x32xf32, #tpu.memory_space<vmem>>, vector<1x2x32xf32>,
    %c5 = arith.constant 5 : index
    %c0_48 = arith.constant 0 : index
    %c0_49 = arith.constant 0 : index
    %163 = vector.load %arg1[%c5, %c0_48, %c0_49] : memref<8x2x128xf32, #tpu.memory_space<vmem>>, vector<1x2x128xf32>
    %164 = vector.shape_cast %163 : vector<1x2x128xf32> to vector<2x128xf32>
    %cst_50 = arith.constant dense<0.000000e+00> : vector<2x128xf32>
    %165 = tpu.matmul %159, %0, %cst_50 {dimension_numbers = #tpu.dot_dimension_numbers<[1], [0], [0], [1], [0, 0, 1, 1], [], []>} : vector<2x32xf32>, vector<32x128xf32>, vector<2x128xf32> -> vector<2x128xf32>
    %166 = arith.addf %164, %165 : vector<2x128xf32>
    %167 = vector.extract_strided_slice %166 {offsets = [0, 0], sizes = [2, 32], strides = [1, 1]} : vector<2x128xf32> to vector<2x32xf32>
    %168 = arith.negf %167 : vector<2x32xf32>
    %169 = math.exp %168 : vector<2x32xf32>
    %cst_51 = arith.constant 1.000000e+00 : f32
    %170 = vector.broadcast %cst_51 : f32 to vector<2x32xf32>
    %171 = arith.addf %170, %169 : vector<2x32xf32>
    %172 = arith.divf %170, %171 : vector<2x32xf32>
    %173 = vector.extract_strided_slice %166 {offsets = [0, 32], sizes = [2, 32], strides = [1, 1]} : vector<2x128xf32> to vector<2x32xf32>
    %174 = arith.negf %173 : vector<2x32xf32>
    %175 = math.exp %174 : vector<2x32xf32>
    %cst_52 = arith.constant 1.000000e+00 : f32
    %176 = vector.broadcast %cst_52 : f32 to vector<2x32xf32>
    %177 = arith.addf %176, %175 : vector<2x32xf32>
    %178 = arith.divf %176, %177 : vector<2x32xf32>
    %179 = vector.extract_strided_slice %166 {offsets = [0, 64], sizes = [2, 32], strides = [1, 1]} : vector<2x128xf32> to vector<2x32xf32>
    %180 = math.tanh %179 : vector<2x32xf32>
    %181 = vector.extract_strided_slice %166 {offsets = [0, 96], sizes = [2, 32], strides = [1, 1]} : vector<2x128xf32> to vector<2x32xf32>
    %182 = arith.negf %181 : vector<2x32xf32>
    %183 = math.exp %182 : vector<2x32xf32>
    %cst_53 = arith.constant 1.000000e+00 : f32
    %184 = vector.broadcast %cst_53 : f32 to vector<2x32xf32>
    %185 = arith.addf %184, %183 : vector<2x32xf32>
    %186 = arith.divf %184, %185 : vector<2x32xf32>
    %187 = arith.mulf %178, %157 : vector<2x32xf32>
    %188 = arith.mulf %172, %180 : vector<2x32xf32>
    %189 = arith.addf %187, %188 : vector<2x32xf32>
    %190 = math.tanh %189 : vector<2x32xf32>
    %191 = arith.mulf %186, %190 : vector<2x32xf32>
    %c5_54 = arith.constant 5 : index
    %c0_55 = arith.constant 0 : index
    %c0_56 = arith.constant 0 : index
    %192 = vector.load %arg3[%c5_54, %c0_55, %c0_56] : memref<8x2x32xf32, #tpu.memory_space<vmem>>, vector<1x2x32xf32>
    %193 = vector.shape_cast %192 : vector<1x2x32xf32> to vector<2x32xf32>
    %194 = vector.shape_cast %191 : vector<2x32xf32> to vector<1x2x32xf32>
    tpu.vector_store %arg3[%c5_54, %c0_55, %c0_56], %194 {strides = array<i32>} : memref<8x2x32xf32, #tpu.memory_space<vmem>>, vector<1x2x32xf32>,
    %c6 = arith.constant 6 : index
    %c0_57 = arith.constant 0 : index
    %c0_58 = arith.constant 0 : index
    %195 = vector.load %arg1[%c6, %c0_57, %c0_58] : memref<8x2x128xf32, #tpu.memory_space<vmem>>, vector<1x2x128xf32>
    %196 = vector.shape_cast %195 : vector<1x2x128xf32> to vector<2x128xf32>
    %cst_59 = arith.constant dense<0.000000e+00> : vector<2x128xf32>
    %197 = tpu.matmul %191, %0, %cst_59 {dimension_numbers = #tpu.dot_dimension_numbers<[1], [0], [0], [1], [0, 0, 1, 1], [], []>} : vector<2x32xf32>, vector<32x128xf32>, vector<2x128xf32> -> vector<2x128xf32>
    %198 = arith.addf %196, %197 : vector<2x128xf32>
    %199 = vector.extract_strided_slice %198 {offsets = [0, 0], sizes = [2, 32], strides = [1, 1]} : vector<2x128xf32> to vector<2x32xf32>
    %200 = arith.negf %199 : vector<2x32xf32>
    %201 = math.exp %200 : vector<2x32xf32>
    %cst_60 = arith.constant 1.000000e+00 : f32
    %202 = vector.broadcast %cst_60 : f32 to vector<2x32xf32>
    %203 = arith.addf %202, %201 : vector<2x32xf32>
    %204 = arith.divf %202, %203 : vector<2x32xf32>
    %205 = vector.extract_strided_slice %198 {offsets = [0, 32], sizes = [2, 32], strides = [1, 1]} : vector<2x128xf32> to vector<2x32xf32>
    %206 = arith.negf %205 : vector<2x32xf32>
    %207 = math.exp %206 : vector<2x32xf32>
    %cst_61 = arith.constant 1.000000e+00 : f32
    %208 = vector.broadcast %cst_61 : f32 to vector<2x32xf32>
    %209 = arith.addf %208, %207 : vector<2x32xf32>
    %210 = arith.divf %208, %209 : vector<2x32xf32>
    %211 = vector.extract_strided_slice %198 {offsets = [0, 64], sizes = [2, 32], strides = [1, 1]} : vector<2x128xf32> to vector<2x32xf32>
    %212 = math.tanh %211 : vector<2x32xf32>
    %213 = vector.extract_strided_slice %198 {offsets = [0, 96], sizes = [2, 32], strides = [1, 1]} : vector<2x128xf32> to vector<2x32xf32>
    %214 = arith.negf %213 : vector<2x32xf32>
    %215 = math.exp %214 : vector<2x32xf32>
    %cst_62 = arith.constant 1.000000e+00 : f32
    %216 = vector.broadcast %cst_62 : f32 to vector<2x32xf32>
    %217 = arith.addf %216, %215 : vector<2x32xf32>
    %218 = arith.divf %216, %217 : vector<2x32xf32>
    %219 = arith.mulf %210, %189 : vector<2x32xf32>
    %220 = arith.mulf %204, %212 : vector<2x32xf32>
    %221 = arith.addf %219, %220 : vector<2x32xf32>
    %222 = math.tanh %221 : vector<2x32xf32>
    %223 = arith.mulf %218, %222 : vector<2x32xf32>
    %c6_63 = arith.constant 6 : index
    %c0_64 = arith.constant 0 : index
    %c0_65 = arith.constant 0 : index
    %224 = vector.load %arg3[%c6_63, %c0_64, %c0_65] : memref<8x2x32xf32, #tpu.memory_space<vmem>>, vector<1x2x32xf32>
    %225 = vector.shape_cast %224 : vector<1x2x32xf32> to vector<2x32xf32>
    %226 = vector.shape_cast %223 : vector<2x32xf32> to vector<1x2x32xf32>
    tpu.vector_store %arg3[%c6_63, %c0_64, %c0_65], %226 {strides = array<i32>} : memref<8x2x32xf32, #tpu.memory_space<vmem>>, vector<1x2x32xf32>,
    %c7 = arith.constant 7 : index
    %c0_66 = arith.constant 0 : index
    %c0_67 = arith.constant 0 : index
    %227 = vector.load %arg1[%c7, %c0_66, %c0_67] : memref<8x2x128xf32, #tpu.memory_space<vmem>>, vector<1x2x128xf32>
    %228 = vector.shape_cast %227 : vector<1x2x128xf32> to vector<2x128xf32>
    %cst_68 = arith.constant dense<0.000000e+00> : vector<2x128xf32>
    %229 = tpu.matmul %223, %0, %cst_68 {dimension_numbers = #tpu.dot_dimension_numbers<[1], [0], [0], [1], [0, 0, 1, 1], [], []>} : vector<2x32xf32>, vector<32x128xf32>, vector<2x128xf32> -> vector<2x128xf32>
    %230 = arith.addf %228, %229 : vector<2x128xf32>
    %231 = vector.extract_strided_slice %230 {offsets = [0, 0], sizes = [2, 32], strides = [1, 1]} : vector<2x128xf32> to vector<2x32xf32>
    %232 = arith.negf %231 : vector<2x32xf32>
    %233 = math.exp %232 : vector<2x32xf32>
    %cst_69 = arith.constant 1.000000e+00 : f32
    %234 = vector.broadcast %cst_69 : f32 to vector<2x32xf32>
    %235 = arith.addf %234, %233 : vector<2x32xf32>
    %236 = arith.divf %234, %235 : vector<2x32xf32>
    %237 = vector.extract_strided_slice %230 {offsets = [0, 32], sizes = [2, 32], strides = [1, 1]} : vector<2x128xf32> to vector<2x32xf32>
    %238 = arith.negf %237 : vector<2x32xf32>
    %239 = math.exp %238 : vector<2x32xf32>
    %cst_70 = arith.constant 1.000000e+00 : f32
    %240 = vector.broadcast %cst_70 : f32 to vector<2x32xf32>
    %241 = arith.addf %240, %239 : vector<2x32xf32>
    %242 = arith.divf %240, %241 : vector<2x32xf32>
    %243 = vector.extract_strided_slice %230 {offsets = [0, 64], sizes = [2, 32], strides = [1, 1]} : vector<2x128xf32> to vector<2x32xf32>
    %244 = math.tanh %243 : vector<2x32xf32>
    %245 = vector.extract_strided_slice %230 {offsets = [0, 96], sizes = [2, 32], strides = [1, 1]} : vector<2x128xf32> to vector<2x32xf32>
    %246 = arith.negf %245 : vector<2x32xf32>
    %247 = math.exp %246 : vector<2x32xf32>
    %cst_71 = arith.constant 1.000000e+00 : f32
    %248 = vector.broadcast %cst_71 : f32 to vector<2x32xf32>
    %249 = arith.addf %248, %247 : vector<2x32xf32>
    %250 = arith.divf %248, %249 : vector<2x32xf32>
    %251 = arith.mulf %242, %221 : vector<2x32xf32>
    %252 = arith.mulf %236, %244 : vector<2x32xf32>
    %253 = arith.addf %251, %252 : vector<2x32xf32>
    %254 = math.tanh %253 : vector<2x32xf32>
    %255 = arith.mulf %250, %254 : vector<2x32xf32>
    %c7_72 = arith.constant 7 : index
    %c0_73 = arith.constant 0 : index
    %c0_74 = arith.constant 0 : index
    %256 = vector.load %arg3[%c7_72, %c0_73, %c0_74] : memref<8x2x32xf32, #tpu.memory_space<vmem>>, vector<1x2x32xf32>
    %257 = vector.shape_cast %256 : vector<1x2x32xf32> to vector<2x32xf32>
    %258 = vector.shape_cast %255 : vector<2x32xf32> to vector<1x2x32xf32>
    tpu.vector_store %arg3[%c7_72, %c0_73, %c0_74], %258 {strides = array<i32>} : memref<8x2x32xf32, #tpu.memory_space<vmem>>, vector<1x2x32xf32>,
    %c0_75 = arith.constant 0 : index
    %c0_76 = arith.constant 0 : index
    %259 = vector.load %arg4[%c0_75, %c0_76] : memref<2x32xf32, #tpu.memory_space<vmem>>, vector<2x32xf32>
    tpu.vector_store %arg4[%c0_75, %c0_76], %255 {strides = array<i32>} : memref<2x32xf32, #tpu.memory_space<vmem>>, vector<2x32xf32>,
    %c0_77 = arith.constant 0 : index
    %c0_78 = arith.constant 0 : index
    %260 = vector.load %arg5[%c0_77, %c0_78] : memref<2x32xf32, #tpu.memory_space<vmem>>, vector<2x32xf32>
    tpu.vector_store %arg5[%c0_77, %c0_78], %253 {strides = array<i32>} : memref<2x32xf32, #tpu.memory_space<vmem>>, vector<2x32xf32>,
    return
  }
  func.func @transform_0(%arg0: i32) -> (i32, i32, i32) {
    %c0_i32 = arith.constant 0 : i32
    %c0_i32_0 = arith.constant 0 : i32
    %c0_i32_1 = arith.constant 0 : i32
    %c0_i32_2 = arith.constant 0 : i32
    return %c0_i32, %c0_i32_0, %c0_i32_1 : i32, i32, i32
  }
  func.func @transform_1(%arg0: i32) -> (i32, i32) {
    %c0_i32 = arith.constant 0 : i32
    %c0_i32_0 = arith.constant 0 : i32
    %c0_i32_1 = arith.constant 0 : i32
    return %c0_i32, %c0_i32_0 : i32, i32
  }
  func.func @transform_2(%arg0: i32) -> (i32, i32, i32) {
    %c0_i32 = arith.constant 0 : i32
    %c0_i32_0 = arith.constant 0 : i32
    %c0_i32_1 = arith.constant 0 : i32
    %c0_i32_2 = arith.constant 0 : i32
    return %c0_i32, %c0_i32_0, %c0_i32_1 : i32, i32, i32
  }
  func.func @transform_3(%arg0: i32) -> (i32, i32) {
    %c0_i32 = arith.constant 0 : i32
    %c0_i32_0 = arith.constant 0 : i32
    %c0_i32_1 = arith.constant 0 : i32
    return %c0_i32, %c0_i32_0 : i32, i32
  }
  func.func @transform_4(%arg0: i32) -> (i32, i32) {
    %c0_i32 = arith.constant 0 : i32
    %c0_i32_0 = arith.constant 0 : i32
    %c0_i32_1 = arith.constant 0 : i32
    return %c0_i32, %c0_i32_0 : i32, i32
  }
}

</mosaic_0001>

<llo_original>
// kernel: lstm_model_forward.1
$region0: #{lstm_model_forward.1}
  #allocation0 [shape = 'u32[]', space=smem, size = 0x4, offset = 0x4, fixed_abs, tag = 'smem constant byte address 0x4 - core index']
  #allocation1 [shape = 'u32[144,128]{1,0:T(1,128)}', space=vmem, size = 0x12000, scoped, tag = 'internal scratch']
  %s0 = inlined_call_operand.vmem [shape: f32[8,2,128], index: 0, kind: input, shape index: {}]
  %s1 = inlined_call_operand.vmem [shape: f32[32,128], index: 1, kind: input, shape index: {}]
  %s2 = inlined_call_operand.vmem [shape: f32[8,2,32], index: 2, kind: output, shape index: {0}]
  %s3 = inlined_call_operand.vmem [shape: f32[2,32], index: 3, kind: output, shape index: {1}]
  %s4 = inlined_call_operand.hbm [shape: f32[2,32], index: 4, kind: output, shape index: {2}]
  %5 = xla_tuple %s2, %s3, %s4
  %s6 = sld [smem:[#allocation0]]
  $region34: #{lstm_model_forward.1} parent=0
    _
  %s8 = ssub.s32 1, %s6
  %s9 = scalar_select 0, %s8, %s6
  $region1: #{lstm_model_forward.1} parent=0
    #allocation2 [shape = 'u8[1024]{0}', space=vmem, size = 0x400, scoped, tag = 'output window, operand 2, single buffered']
    #allocation3 [shape = 's32[1]{0}', space=sflag, size = 0x4, scoped, tag = 'scoped memory for lstm_model_forward.1']
    %10 = vsyncpa [#allocation3], 0
    // Predicated region
    $region2: #{lstm_model_forward.1} parent=1 // pred_check
      _
    $region3: #{lstm_model_forward.1} parent=1 // pred_check_branch
      %12 = sbr.rel (0) target = $region5
    $region4: #{lstm_model_forward.1} parent=1 // pred_region
      _
    $region5: #{lstm_model_forward.1} parent=1 // pred_fallthru
      _
    // Predicated region
    $region6: #{lstm_model_forward.1} parent=1 // pred_check
      _
    $region7: #{lstm_model_forward.1} parent=1 // pred_check_branch
      %14 = sbr.rel (0) target = $region9
    $region8: #{lstm_model_forward.1} parent=1 // pred_region
      _
    $region9: #{lstm_model_forward.1} parent=1 // pred_fallthru
      _
    %v15 = vld [vmem:[%s1] sm:$0xff]
    %v16 = vld [vmem:[%s1 + $0x8] sm:$0xff]
    %v17 = vld [vmem:[%s1 + $0x10] sm:$0xff]
    %v18 = vld [vmem:[%s1 + $0x18] sm:$0xff]
    %v19 = vld [vmem:[%s0] sm:$0x3]
    %vm20 = vcmask 261120
    %v22 = vsel %vm20, 0.0, 0
    %24 = vmatprep.subr.mxu0 0.0
    %25 = vmatpush1.msra.mxu0 0.0
    %26 = vmatprep.subr.mxu0 0.0
    %27 = vmatpush1.msra.mxu0 0.0
    %28 = vmatprep.subr.mxu0 0.0
    %29 = vmatpush1.msra.mxu0 0.0
    %30 = vmatprep.subr.mxu0 0.0
    %31 = vmatpush1.msra.mxu0 0.0
    %32 = vmatprep.subr.mxu0 0.0
    %33 = vmatpush1.msra.mxu0 0.0
    %34 = vmatprep.subr.mxu0 0.0
    %35 = vmatpush1.msra.mxu0 0.0
    %36 = vmatprep.subr.mxu0 0.0
    %37 = vmatpush1.msra.mxu0 0.0
    %38 = vmatprep.subr.mxu0 0.0
    %39 = vmatpush1.msra.mxu0 0.0
    %40 = vmatprep.subr.mxu0 0.0
    %41 = vmatpush1.msra.mxu0 0.0
    %42 = vmatprep.subr.mxu0 0.0
    %43 = vmatpush1.msra.mxu0 0.0
    %44 = vmatprep.subr.mxu0 0.0
    %45 = vmatpush1.msra.mxu0 0.0
    %46 = vmatprep.subr.mxu0 0.0
    %47 = vmatpush1.msra.mxu0 0.0
    %48 = vmatprep.subr.mxu0 0.0
    %49 = vmatpush1.msra.mxu0 %v18
    %50 = vmatprep.subr.mxu0 0.0
    %51 = vmatpush1.msra.mxu0 %v17
    %52 = vmatprep.subr.mxu0 0.0
    %53 = vmatpush1.msra.mxu0 %v16
    %54 = vmatprep.subr.mxu0 0.0
    %55 = vmatpush1.msra.mxu0 %v15
    %56 = vmatprep.subr.mxu0 0.0
    %57 = vmatpush2.msra.mxu0 0.0
    %58 = vmatprep.subr.mxu0 0.0
    %59 = vmatpush2.msra.mxu0 0.0
    %60 = vmatprep.subr.mxu0 0.0
    %61 = vmatpush2.msra.mxu0 0.0
    %62 = vmatprep.subr.mxu0 0.0
    %63 = vmatpush2.msra.mxu0 0.0
    %64 = vmatprep.subr.mxu0 0.0
    %65 = vmatpush2.msra.mxu0 0.0
    %66 = vmatprep.subr.mxu0 0.0
    %67 = vmatpush2.msra.mxu0 0.0
    %68 = vmatprep.subr.mxu0 0.0
    %69 = vmatpush2.msra.mxu0 0.0
    %70 = vmatprep.subr.mxu0 0.0
    %71 = vmatpush2.msra.mxu0 0.0
    %72 = vmatprep.subr.mxu0 0.0
    %73 = vmatpush2.msra.mxu0 0.0
    %74 = vmatprep.subr.mxu0 0.0
    %75 = vmatpush2.msra.mxu0 0.0
    %76 = vmatprep.subr.mxu0 0.0
    %77 = vmatpush2.msra.mxu0 0.0
    %78 = vmatprep.subr.mxu0 0.0
    %79 = vmatpush2.msra.mxu0 0.0
    %80 = vmatprep.subr.mxu0 0.0
    %81 = vmatpush2.msra.mxu0 0.0
    %82 = vmatprep.subr.mxu0 0.0
    %83 = vmatpush2.msra.mxu0 0.0
    %84 = vmatprep.subr.mxu0 0.0
    %85 = vmatpush2.msra.mxu0 0.0
    %86 = vmatprep.subr.mxu0 0.0
    %87 = vmatpush2.msra.mxu0 0.0
    %88 = vmatprep.mubr.f32.mxu0 0.0
    %89 = vmatmul.mubr.f32.gmra.mxu0 %v22
    %v90 = vpop.f32.mrf.mxu0
    %v91 = vadd.f32 0.0, %v90
    %v92 = vpop.f32.mrf.mxu0
    %93 = vdwg.mxu0
    %v94 = vadd.f32 %v19, %v91
    %v95 = vxor.u32 %v94, 2147483648
    %v96 = vmul.f32 %v95, 1.442695
    %v97 = vpow.pop %v96
    %v98 = vadd.f32 %v97, 1.0
    %v99 = vrcp.pop %v98
    %v100 = vmul.f32 1.0, %v99
    %v101 = vtanh.pop %v94
    %v102 = vmul.f32 %v100, 0.0
    %104 = vrot.lane.b32.xlu0 %v101, 64
    %v105 = vpop.permute.xlu0 %104
    %v107 = vmul.f32 %v100, %v105
    %109 = vrot.lane.b32.xlu0 %v107, 32
    %v110 = vpop.permute.xlu0 %109
    %v112 = vadd.f32 %v102, %v110
    %v113 = vtanh.pop %v112
    %115 = vrot.lane.b32.xlu0 %v113, 64
    %v116 = vpop.permute.xlu0 %115
    %v118 = vmul.f32 %v100, %v116
    %120 = vrot.lane.b32.xlu0 %v118, 32
    %v121 = vpop.permute.xlu0 %120
    %vm123 = vcmask 254976
    %124 = vst.msk [vmem:[%s2] sm:$0x3] %vm123, %v121
    %s125 = scalar_lea.vmem %s0, 2
    %v126 = vld [vmem:[%s125] sm:$0x3]
    %v127 = vsel %vm20, %v121, 0
    %129 = vmatprep.subr.mxu0 0.0
    %130 = vmatpush1.msra.mxu0 0.0
    %131 = vmatprep.subr.mxu0 0.0
    %132 = vmatpush1.msra.mxu0 0.0
    %133 = vmatprep.subr.mxu0 0.0
    %134 = vmatpush1.msra.mxu0 0.0
    %135 = vmatprep.subr.mxu0 0.0
    %136 = vmatpush1.msra.mxu0 0.0
    %137 = vmatprep.subr.mxu0 0.0
    %138 = vmatpush1.msra.mxu0 0.0
    %139 = vmatprep.subr.mxu0 0.0
    %140 = vmatpush1.msra.mxu0 0.0
    %141 = vmatprep.subr.mxu0 0.0
    %142 = vmatpush1.msra.mxu0 0.0
    %143 = vmatprep.subr.mxu0 0.0
    %144 = vmatpush1.msra.mxu0 0.0
    %145 = vmatprep.subr.mxu0 0.0
    %146 = vmatpush1.msra.mxu0 0.0
    %147 = vmatprep.subr.mxu0 0.0
    %148 = vmatpush1.msra.mxu0 0.0
    %149 = vmatprep.subr.mxu0 0.0
    %150 = vmatpush1.msra.mxu0 0.0
    %151 = vmatprep.subr.mxu0 0.0
    %152 = vmatpush1.msra.mxu0 0.0
    %153 = vmatprep.subr.mxu0 0.0
    %154 = vmatpush1.msra.mxu0 %v18
    %155 = vmatprep.subr.mxu0 0.0
    %156 = vmatpush1.msra.mxu0 %v17
    %157 = vmatprep.subr.mxu0 0.0
    %158 = vmatpush1.msra.mxu0 %v16
    %159 = vmatprep.subr.mxu0 0.0
    %160 = vmatpush1.msra.mxu0 %v15
    %161 = vmatprep.subr.mxu0 0.0
    %162 = vmatpush2.msra.mxu0 0.0
    %163 = vmatprep.subr.mxu0 0.0
    %164 = vmatpush2.msra.mxu0 0.0
    %165 = vmatprep.subr.mxu0 0.0
    %166 = vmatpush2.msra.mxu0 0.0
    %167 = vmatprep.subr.mxu0 0.0
    %168 = vmatpush2.msra.mxu0 0.0
    %169 = vmatprep.subr.mxu0 0.0
    %170 = vmatpush2.msra.mxu0 0.0
    %171 = vmatprep.subr.mxu0 0.0
    %172 = vmatpush2.msra.mxu0 0.0
    %173 = vmatprep.subr.mxu0 0.0
    %174 = vmatpush2.msra.mxu0 0.0
    %175 = vmatprep.subr.mxu0 0.0
    %176 = vmatpush2.msra.mxu0 0.0
    %177 = vmatprep.subr.mxu0 0.0
    %178 = vmatpush2.msra.mxu0 0.0
    %179 = vmatprep.subr.mxu0 0.0
    %180 = vmatpush2.msra.mxu0 0.0
    %181 = vmatprep.subr.mxu0 0.0
    %182 = vmatpush2.msra.mxu0 0.0
    %183 = vmatprep.subr.mxu0 0.0
    %184 = vmatpush2.msra.mxu0 0.0
    %185 = vmatprep.subr.mxu0 0.0
    %186 = vmatpush2.msra.mxu0 0.0
    %187 = vmatprep.subr.mxu0 0.0
    %188 = vmatpush2.msra.mxu0 0.0
    %189 = vmatprep.subr.mxu0 0.0
    %190 = vmatpush2.msra.mxu0 0.0
    %191 = vmatprep.subr.mxu0 0.0
    %192 = vmatpush2.msra.mxu0 0.0
    %193 = vmatprep.mubr.f32.mxu0 0.0
    %194 = vmatmul.mubr.f32.gmra.mxu0 %v127
    %v195 = vpop.f32.mrf.mxu0
    %v196 = vadd.f32 0.0, %v195
    %v197 = vpop.f32.mrf.mxu0
    %198 = vdwg.mxu0
    %v199 = vadd.f32 %v126, %v196
    %v200 = vxor.u32 %v199, 2147483648
    %v201 = vmul.f32 %v200, 1.442695
    %v202 = vpow.pop %v201
    %v203 = vadd.f32 %v202, 1.0
    %v204 = vrcp.pop %v203
    %v205 = vmul.f32 1.0, %v204
    %v206 = vtanh.pop %v199
    %v207 = vmul.f32 %v205, %v112
    %209 = vrot.lane.b32.xlu0 %v206, 64
    %v210 = vpop.permute.xlu0 %209
    %v212 = vmul.f32 %v205, %v210
    %214 = vrot.lane.b32.xlu0 %v212, 32
    %v215 = vpop.permute.xlu0 %214
    %v217 = vadd.f32 %v207, %v215
    %v218 = vtanh.pop %v217
    %220 = vrot.lane.b32.xlu0 %v218, 64
    %v221 = vpop.permute.xlu0 %220
    %v223 = vmul.f32 %v205, %v221
    %225 = vrot.lane.b32.xlu0 %v223, 32
    %v226 = vpop.permute.xlu0 %225
    %s228 = scalar_lea.vmem %s2, 2
    %229 = vst.msk [vmem:[%s228] sm:$0x3] %vm123, %v226
    %s230 = scalar_lea.vmem %s0, 4
    %v231 = vld [vmem:[%s230] sm:$0x3]
    %v232 = vsel %vm20, %v226, 0
    %234 = vmatprep.subr.mxu0 0.0
    %235 = vmatpush1.msra.mxu0 0.0
    %236 = vmatprep.subr.mxu0 0.0
    %237 = vmatpush1.msra.mxu0 0.0
    %238 = vmatprep.subr.mxu0 0.0
    %239 = vmatpush1.msra.mxu0 0.0
    %240 = vmatprep.subr.mxu0 0.0
    %241 = vmatpush1.msra.mxu0 0.0
    %242 = vmatprep.subr.mxu0 0.0
    %243 = vmatpush1.msra.mxu0 0.0
    %244 = vmatprep.subr.mxu0 0.0
    %245 = vmatpush1.msra.mxu0 0.0
    %246 = vmatprep.subr.mxu0 0.0
    %247 = vmatpush1.msra.mxu0 0.0
    %248 = vmatprep.subr.mxu0 0.0
    %249 = vmatpush1.msra.mxu0 0.0
    %250 = vmatprep.subr.mxu0 0.0
    %251 = vmatpush1.msra.mxu0 0.0
    %252 = vmatprep.subr.mxu0 0.0
    %253 = vmatpush1.msra.mxu0 0.0
    %254 = vmatprep.subr.mxu0 0.0
    %255 = vmatpush1.msra.mxu0 0.0
    %256 = vmatprep.subr.mxu0 0.0
    %257 = vmatpush1.msra.mxu0 0.0
    %258 = vmatprep.subr.mxu0 0.0
    %259 = vmatpush1.msra.mxu0 %v18
    %260 = vmatprep.subr.mxu0 0.0
    %261 = vmatpush1.msra.mxu0 %v17
    %262 = vmatprep.subr.mxu0 0.0
    %263 = vmatpush1.msra.mxu0 %v16
    %264 = vmatprep.subr.mxu0 0.0
    %265 = vmatpush1.msra.mxu0 %v15
    %266 = vmatprep.subr.mxu0 0.0
    %267 = vmatpush2.msra.mxu0 0.0
    %268 = vmatprep.subr.mxu0 0.0
    %269 = vmatpush2.msra.mxu0 0.0
    %270 = vmatprep.subr.mxu0 0.0
    %271 = vmatpush2.msra.mxu0 0.0
    %272 = vmatprep.subr.mxu0 0.0
    %273 = vmatpush2.msra.mxu0 0.0
    %274 = vmatprep.subr.mxu0 0.0
    %275 = vmatpush2.msra.mxu0 0.0
    %276 = vmatprep.subr.mxu0 0.0
    %277 = vmatpush2.msra.mxu0 0.0
    %278 = vmatprep.subr.mxu0 0.0
    %279 = vmatpush2.msra.mxu0 0.0
    %280 = vmatprep.subr.mxu0 0.0
    %281 = vmatpush2.msra.mxu0 0.0
    %282 = vmatprep.subr.mxu0 0.0
    %283 = vmatpush2.msra.mxu0 0.0
    %284 = vmatprep.subr.mxu0 0.0
    %285 = vmatpush2.msra.mxu0 0.0
    %286 = vmatprep.subr.mxu0 0.0
    %287 = vmatpush2.msra.mxu0 0.0
    %288 = vmatprep.subr.mxu0 0.0
    %289 = vmatpush2.msra.mxu0 0.0
    %290 = vmatprep.subr.mxu0 0.0
    %291 = vmatpush2.msra.mxu0 0.0
    %292 = vmatprep.subr.mxu0 0.0
    %293 = vmatpush2.msra.mxu0 0.0
    %294 = vmatprep.subr.mxu0 0.0
    %295 = vmatpush2.msra.mxu0 0.0
    %296 = vmatprep.subr.mxu0 0.0
    %297 = vmatpush2.msra.mxu0 0.0
    %298 = vmatprep.mubr.f32.mxu0 0.0
    %299 = vmatmul.mubr.f32.gmra.mxu0 %v232
    %v300 = vpop.f32.mrf.mxu0
    %v301 = vadd.f32 0.0, %v300
    %v302 = vpop.f32.mrf.mxu0
    %303 = vdwg.mxu0
    %v304 = vadd.f32 %v231, %v301
    %v305 = vxor.u32 %v304, 2147483648
    %v306 = vmul.f32 %v305, 1.442695
    %v307 = vpow.pop %v306
    %v308 = vadd.f32 %v307, 1.0
    %v309 = vrcp.pop %v308
    %v310 = vmul.f32 1.0, %v309
    %v311 = vtanh.pop %v304
    %v312 = vmul.f32 %v310, %v217
    %314 = vrot.lane.b32.xlu0 %v311, 64
    %v315 = vpop.permute.xlu0 %314
    %v317 = vmul.f32 %v310, %v315
    %319 = vrot.lane.b32.xlu0 %v317, 32
    %v320 = vpop.permute.xlu0 %319
    %v322 = vadd.f32 %v312, %v320
    %v323 = vtanh.pop %v322
    %325 = vrot.lane.b32.xlu0 %v323, 64
    %v326 = vpop.permute.xlu0 %325
    %v328 = vmul.f32 %v310, %v326
    %330 = vrot.lane.b32.xlu0 %v328, 32
    %v331 = vpop.permute.xlu0 %330
    %s333 = scalar_lea.vmem %s2, 4
    %334 = vst.msk [vmem:[%s333] sm:$0x3] %vm123, %v331
    %s335 = scalar_lea.vmem %s0, 6
    %v336 = vld [vmem:[%s335] sm:$0x3]
    %v337 = vsel %vm20, %v331, 0
    %339 = vmatprep.subr.mxu0 0.0
    %340 = vmatpush1.msra.mxu0 0.0
    %341 = vmatprep.subr.mxu0 0.0
    %342 = vmatpush1.msra.mxu0 0.0
    %343 = vmatprep.subr.mxu0 0.0
    %344 = vmatpush1.msra.mxu0 0.0
    %345 = vmatprep.subr.mxu0 0.0
    %346 = vmatpush1.msra.mxu0 0.0
    %347 = vmatprep.subr.mxu0 0.0
    %348 = vmatpush1.msra.mxu0 0.0
    %349 = vmatprep.subr.mxu0 0.0
    %350 = vmatpush1.msra.mxu0 0.0
    %351 = vmatprep.subr.mxu0 0.0
    %352 = vmatpush1.msra.mxu0 0.0
    %353 = vmatprep.subr.mxu0 0.0
    %354 = vmatpush1.msra.mxu0 0.0
    %355 = vmatprep.subr.mxu0 0.0
    %356 = vmatpush1.msra.mxu0 0.0
    %357 = vmatprep.subr.mxu0 0.0
    %358 = vmatpush1.msra.mxu0 0.0
    %359 = vmatprep.subr.mxu0 0.0
    %360 = vmatpush1.msra.mxu0 0.0
    %361 = vmatprep.subr.mxu0 0.0
    %362 = vmatpush1.msra.mxu0 0.0
    %363 = vmatprep.subr.mxu0 0.0
    %364 = vmatpush1.msra.mxu0 %v18
    %365 = vmatprep.subr.mxu0 0.0
    %366 = vmatpush1.msra.mxu0 %v17
    %367 = vmatprep.subr.mxu0 0.0
    %368 = vmatpush1.msra.mxu0 %v16
    %369 = vmatprep.subr.mxu0 0.0
    %370 = vmatpush1.msra.mxu0 %v15
    %371 = vmatprep.subr.mxu0 0.0
    %372 = vmatpush2.msra.mxu0 0.0
    %373 = vmatprep.subr.mxu0 0.0
    %374 = vmatpush2.msra.mxu0 0.0
    %375 = vmatprep.subr.mxu0 0.0
    %376 = vmatpush2.msra.mxu0 0.0
    %377 = vmatprep.subr.mxu0 0.0
    %378 = vmatpush2.msra.mxu0 0.0
    %379 = vmatprep.subr.mxu0 0.0
    %380 = vmatpush2.msra.mxu0 0.0
    %381 = vmatprep.subr.mxu0 0.0
    %382 = vmatpush2.msra.mxu0 0.0
    %383 = vmatprep.subr.mxu0 0.0
    %384 = vmatpush2.msra.mxu0 0.0
    %385 = vmatprep.subr.mxu0 0.0
    %386 = vmatpush2.msra.mxu0 0.0
    %387 = vmatprep.subr.mxu0 0.0
    %388 = vmatpush2.msra.mxu0 0.0
    %389 = vmatprep.subr.mxu0 0.0
    %390 = vmatpush2.msra.mxu0 0.0
    %391 = vmatprep.subr.mxu0 0.0
    %392 = vmatpush2.msra.mxu0 0.0
    %393 = vmatprep.subr.mxu0 0.0
    %394 = vmatpush2.msra.mxu0 0.0
    %395 = vmatprep.subr.mxu0 0.0
    %396 = vmatpush2.msra.mxu0 0.0
    %397 = vmatprep.subr.mxu0 0.0
    %398 = vmatpush2.msra.mxu0 0.0
    %399 = vmatprep.subr.mxu0 0.0
    %400 = vmatpush2.msra.mxu0 0.0
    %401 = vmatprep.subr.mxu0 0.0
    %402 = vmatpush2.msra.mxu0 0.0
    %403 = vmatprep.mubr.f32.mxu0 0.0
    %404 = vmatmul.mubr.f32.gmra.mxu0 %v337
    %v405 = vpop.f32.mrf.mxu0
    %v406 = vadd.f32 0.0, %v405
    %v407 = vpop.f32.mrf.mxu0
    %408 = vdwg.mxu0
    %v409 = vadd.f32 %v336, %v406
    %v410 = vxor.u32 %v409, 2147483648
    %v411 = vmul.f32 %v410, 1.442695
    %v412 = vpow.pop %v411
    %v413 = vadd.f32 %v412, 1.0
    %v414 = vrcp.pop %v413
    %v415 = vmul.f32 1.0, %v414
    %v416 = vtanh.pop %v409
    %v417 = vmul.f32 %v415, %v322
    %419 = vrot.lane.b32.xlu0 %v416, 64
    %v420 = vpop.permute.xlu0 %419
    %v422 = vmul.f32 %v415, %v420
    %424 = vrot.lane.b32.xlu0 %v422, 32
    %v425 = vpop.permute.xlu0 %424
    %v427 = vadd.f32 %v417, %v425
    %v428 = vtanh.pop %v427
    %430 = vrot.lane.b32.xlu0 %v428, 64
    %v431 = vpop.permute.xlu0 %430
    %v433 = vmul.f32 %v415, %v431
    %435 = vrot.lane.b32.xlu0 %v433, 32
    %v436 = vpop.permute.xlu0 %435
    %s438 = scalar_lea.vmem %s2, 6
    %439 = vst.msk [vmem:[%s438] sm:$0x3] %vm123, %v436
    %s440 = scalar_lea.vmem %s0, 8
    %v441 = vld [vmem:[%s440] sm:$0x3]
    %v442 = vsel %vm20, %v436, 0
    %444 = vmatprep.subr.mxu0 0.0
    %445 = vmatpush1.msra.mxu0 0.0
    %446 = vmatprep.subr.mxu0 0.0
    %447 = vmatpush1.msra.mxu0 0.0
    %448 = vmatprep.subr.mxu0 0.0
    %449 = vmatpush1.msra.mxu0 0.0
    %450 = vmatprep.subr.mxu0 0.0
    %451 = vmatpush1.msra.mxu0 0.0
    %452 = vmatprep.subr.mxu0 0.0
    %453 = vmatpush1.msra.mxu0 0.0
    %454 = vmatprep.subr.mxu0 0.0
    %455 = vmatpush1.msra.mxu0 0.0
    %456 = vmatprep.subr.mxu0 0.0
    %457 = vmatpush1.msra.mxu0 0.0
    %458 = vmatprep.subr.mxu0 0.0
    %459 = vmatpush1.msra.mxu0 0.0
    %460 = vmatprep.subr.mxu0 0.0
    %461 = vmatpush1.msra.mxu0 0.0
    %462 = vmatprep.subr.mxu0 0.0
    %463 = vmatpush1.msra.mxu0 0.0
    %464 = vmatprep.subr.mxu0 0.0
    %465 = vmatpush1.msra.mxu0 0.0
    %466 = vmatprep.subr.mxu0 0.0
    %467 = vmatpush1.msra.mxu0 0.0
    %468 = vmatprep.subr.mxu0 0.0
    %469 = vmatpush1.msra.mxu0 %v18
    %470 = vmatprep.subr.mxu0 0.0
    %471 = vmatpush1.msra.mxu0 %v17
    %472 = vmatprep.subr.mxu0 0.0
    %473 = vmatpush1.msra.mxu0 %v16
    %474 = vmatprep.subr.mxu0 0.0
    %475 = vmatpush1.msra.mxu0 %v15
    %476 = vmatprep.subr.mxu0 0.0
    %477 = vmatpush2.msra.mxu0 0.0
    %478 = vmatprep.subr.mxu0 0.0
    %479 = vmatpush2.msra.mxu0 0.0
    %480 = vmatprep.subr.mxu0 0.0
    %481 = vmatpush2.msra.mxu0 0.0
    %482 = vmatprep.subr.mxu0 0.0
    %483 = vmatpush2.msra.mxu0 0.0
    %484 = vmatprep.subr.mxu0 0.0
    %485 = vmatpush2.msra.mxu0 0.0
    %486 = vmatprep.subr.mxu0 0.0
    %487 = vmatpush2.msra.mxu0 0.0
    %488 = vmatprep.subr.mxu0 0.0
    %489 = vmatpush2.msra.mxu0 0.0
    %490 = vmatprep.subr.mxu0 0.0
    %491 = vmatpush2.msra.mxu0 0.0
    %492 = vmatprep.subr.mxu0 0.0
    %493 = vmatpush2.msra.mxu0 0.0
    %494 = vmatprep.subr.mxu0 0.0
    %495 = vmatpush2.msra.mxu0 0.0
    %496 = vmatprep.subr.mxu0 0.0
    %497 = vmatpush2.msra.mxu0 0.0
    %498 = vmatprep.subr.mxu0 0.0
    %499 = vmatpush2.msra.mxu0 0.0
    %500 = vmatprep.subr.mxu0 0.0
    %501 = vmatpush2.msra.mxu0 0.0
    %502 = vmatprep.subr.mxu0 0.0
    %503 = vmatpush2.msra.mxu0 0.0
    %504 = vmatprep.subr.mxu0 0.0
    %505 = vmatpush2.msra.mxu0 0.0
    %506 = vmatprep.subr.mxu0 0.0
    %507 = vmatpush2.msra.mxu0 0.0
    %508 = vmatprep.mubr.f32.mxu0 0.0
    %509 = vmatmul.mubr.f32.gmra.mxu0 %v442
    %v510 = vpop.f32.mrf.mxu0
    %v511 = vadd.f32 0.0, %v510
    %v512 = vpop.f32.mrf.mxu0
    %513 = vdwg.mxu0
    %v514 = vadd.f32 %v441, %v511
    %v515 = vxor.u32 %v514, 2147483648
    %v516 = vmul.f32 %v515, 1.442695
    %v517 = vpow.pop %v516
    %v518 = vadd.f32 %v517, 1.0
    %v519 = vrcp.pop %v518
    %v520 = vmul.f32 1.0, %v519
    %v521 = vtanh.pop %v514
    %v522 = vmul.f32 %v520, %v427
    %524 = vrot.lane.b32.xlu0 %v521, 64
    %v525 = vpop.permute.xlu0 %524
    %v527 = vmul.f32 %v520, %v525
    %529 = vrot.lane.b32.xlu0 %v527, 32
    %v530 = vpop.permute.xlu0 %529
    %v532 = vadd.f32 %v522, %v530
    %v533 = vtanh.pop %v532
    %535 = vrot.lane.b32.xlu0 %v533, 64
    %v536 = vpop.permute.xlu0 %535
    %v538 = vmul.f32 %v520, %v536
    %540 = vrot.lane.b32.xlu0 %v538, 32
    %v541 = vpop.permute.xlu0 %540
    %s543 = scalar_lea.vmem %s2, 8
    %544 = vst.msk [vmem:[%s543] sm:$0x3] %vm123, %v541
    %s545 = scalar_lea.vmem %s0, 10
    %v546 = vld [vmem:[%s545] sm:$0x3]
    %v547 = vsel %vm20, %v541, 0
    %549 = vmatprep.subr.mxu0 0.0
    %550 = vmatpush1.msra.mxu0 0.0
    %551 = vmatprep.subr.mxu0 0.0
    %552 = vmatpush1.msra.mxu0 0.0
    %553 = vmatprep.subr.mxu0 0.0
    %554 = vmatpush1.msra.mxu0 0.0
    %555 = vmatprep.subr.mxu0 0.0
    %556 = vmatpush1.msra.mxu0 0.0
    %557 = vmatprep.subr.mxu0 0.0
    %558 = vmatpush1.msra.mxu0 0.0
    %559 = vmatprep.subr.mxu0 0.0
    %560 = vmatpush1.msra.mxu0 0.0
    %561 = vmatprep.subr.mxu0 0.0
    %562 = vmatpush1.msra.mxu0 0.0
    %563 = vmatprep.subr.mxu0 0.0
    %564 = vmatpush1.msra.mxu0 0.0
    %565 = vmatprep.subr.mxu0 0.0
    %566 = vmatpush1.msra.mxu0 0.0
    %567 = vmatprep.subr.mxu0 0.0
    %568 = vmatpush1.msra.mxu0 0.0
    %569 = vmatprep.subr.mxu0 0.0
    %570 = vmatpush1.msra.mxu0 0.0
    %571 = vmatprep.subr.mxu0 0.0
    %572 = vmatpush1.msra.mxu0 0.0
    %573 = vmatprep.subr.mxu0 0.0
    %574 = vmatpush1.msra.mxu0 %v18
    %575 = vmatprep.subr.mxu0 0.0
    %576 = vmatpush1.msra.mxu0 %v17
    %577 = vmatprep.subr.mxu0 0.0
    %578 = vmatpush1.msra.mxu0 %v16
    %579 = vmatprep.subr.mxu0 0.0
    %580 = vmatpush1.msra.mxu0 %v15
    %581 = vmatprep.subr.mxu0 0.0
    %582 = vmatpush2.msra.mxu0 0.0
    %583 = vmatprep.subr.mxu0 0.0
    %584 = vmatpush2.msra.mxu0 0.0
    %585 = vmatprep.subr.mxu0 0.0
    %586 = vmatpush2.msra.mxu0 0.0
    %587 = vmatprep.subr.mxu0 0.0
    %588 = vmatpush2.msra.mxu0 0.0
    %589 = vmatprep.subr.mxu0 0.0
    %590 = vmatpush2.msra.mxu0 0.0
    %591 = vmatprep.subr.mxu0 0.0
    %592 = vmatpush2.msra.mxu0 0.0
    %593 = vmatprep.subr.mxu0 0.0
    %594 = vmatpush2.msra.mxu0 0.0
    %595 = vmatprep.subr.mxu0 0.0
    %596 = vmatpush2.msra.mxu0 0.0
    %597 = vmatprep.subr.mxu0 0.0
    %598 = vmatpush2.msra.mxu0 0.0
    %599 = vmatprep.subr.mxu0 0.0
    %600 = vmatpush2.msra.mxu0 0.0
    %601 = vmatprep.subr.mxu0 0.0
    %602 = vmatpush2.msra.mxu0 0.0
    %603 = vmatprep.subr.mxu0 0.0
    %604 = vmatpush2.msra.mxu0 0.0
    %605 = vmatprep.subr.mxu0 0.0
    %606 = vmatpush2.msra.mxu0 0.0
    %607 = vmatprep.subr.mxu0 0.0
    %608 = vmatpush2.msra.mxu0 0.0
    %609 = vmatprep.subr.mxu0 0.0
    %610 = vmatpush2.msra.mxu0 0.0
    %611 = vmatprep.subr.mxu0 0.0
    %612 = vmatpush2.msra.mxu0 0.0
    %613 = vmatprep.mubr.f32.mxu0 0.0
    %614 = vmatmul.mubr.f32.gmra.mxu0 %v547
    %v615 = vpop.f32.mrf.mxu0
    %v616 = vadd.f32 0.0, %v615
    %v617 = vpop.f32.mrf.mxu0
    %618 = vdwg.mxu0
    %v619 = vadd.f32 %v546, %v616
    %v620 = vxor.u32 %v619, 2147483648
    %v621 = vmul.f32 %v620, 1.442695
    %v622 = vpow.pop %v621
    %v623 = vadd.f32 %v622, 1.0
    %v624 = vrcp.pop %v623
    %v625 = vmul.f32 1.0, %v624
    %v626 = vtanh.pop %v619
    %v627 = vmul.f32 %v625, %v532
    %629 = vrot.lane.b32.xlu0 %v626, 64
    %v630 = vpop.permute.xlu0 %629
    %v632 = vmul.f32 %v625, %v630
    %634 = vrot.lane.b32.xlu0 %v632, 32
    %v635 = vpop.permute.xlu0 %634
    %v637 = vadd.f32 %v627, %v635
    %v638 = vtanh.pop %v637
    %640 = vrot.lane.b32.xlu0 %v638, 64
    %v641 = vpop.permute.xlu0 %640
    %v643 = vmul.f32 %v625, %v641
    %645 = vrot.lane.b32.xlu0 %v643, 32
    %v646 = vpop.permute.xlu0 %645
    %s648 = scalar_lea.vmem %s2, 10
    %649 = vst.msk [vmem:[%s648] sm:$0x3] %vm123, %v646
    %s650 = scalar_lea.vmem %s0, 12
    %v651 = vld [vmem:[%s650] sm:$0x3]
    %v652 = vsel %vm20, %v646, 0
    %654 = vmatprep.subr.mxu0 0.0
    %655 = vmatpush1.msra.mxu0 0.0
    %656 = vmatprep.subr.mxu0 0.0
    %657 = vmatpush1.msra.mxu0 0.0
    %658 = vmatprep.subr.mxu0 0.0
    %659 = vmatpush1.msra.mxu0 0.0
    %660 = vmatprep.subr.mxu0 0.0
    %661 = vmatpush1.msra.mxu0 0.0
    %662 = vmatprep.subr.mxu0 0.0
    %663 = vmatpush1.msra.mxu0 0.0
    %664 = vmatprep.subr.mxu0 0.0
    %665 = vmatpush1.msra.mxu0 0.0
    %666 = vmatprep.subr.mxu0 0.0
    %667 = vmatpush1.msra.mxu0 0.0
    %668 = vmatprep.subr.mxu0 0.0
    %669 = vmatpush1.msra.mxu0 0.0
    %670 = vmatprep.subr.mxu0 0.0
    %671 = vmatpush1.msra.mxu0 0.0
    %672 = vmatprep.subr.mxu0 0.0
    %673 = vmatpush1.msra.mxu0 0.0
    %674 = vmatprep.subr.mxu0 0.0
    %675 = vmatpush1.msra.mxu0 0.0
    %676 = vmatprep.subr.mxu0 0.0
    %677 = vmatpush1.msra.mxu0 0.0
    %678 = vmatprep.subr.mxu0 0.0
    %679 = vmatpush1.msra.mxu0 %v18
    %680 = vmatprep.subr.mxu0 0.0
    %681 = vmatpush1.msra.mxu0 %v17
    %682 = vmatprep.subr.mxu0 0.0
    %683 = vmatpush1.msra.mxu0 %v16
    %684 = vmatprep.subr.mxu0 0.0
    %685 = vmatpush1.msra.mxu0 %v15
    %686 = vmatprep.subr.mxu0 0.0
    %687 = vmatpush2.msra.mxu0 0.0
    %688 = vmatprep.subr.mxu0 0.0
    %689 = vmatpush2.msra.mxu0 0.0
    %690 = vmatprep.subr.mxu0 0.0
    %691 = vmatpush2.msra.mxu0 0.0
    %692 = vmatprep.subr.mxu0 0.0
    %693 = vmatpush2.msra.mxu0 0.0
    %694 = vmatprep.subr.mxu0 0.0
    %695 = vmatpush2.msra.mxu0 0.0
    %696 = vmatprep.subr.mxu0 0.0
    %697 = vmatpush2.msra.mxu0 0.0
    %698 = vmatprep.subr.mxu0 0.0
    %699 = vmatpush2.msra.mxu0 0.0
    %700 = vmatprep.subr.mxu0 0.0
    %701 = vmatpush2.msra.mxu0 0.0
    %702 = vmatprep.subr.mxu0 0.0
    %703 = vmatpush2.msra.mxu0 0.0
    %704 = vmatprep.subr.mxu0 0.0
    %705 = vmatpush2.msra.mxu0 0.0
    %706 = vmatprep.subr.mxu0 0.0
    %707 = vmatpush2.msra.mxu0 0.0
    %708 = vmatprep.subr.mxu0 0.0
    %709 = vmatpush2.msra.mxu0 0.0
    %710 = vmatprep.subr.mxu0 0.0
    %711 = vmatpush2.msra.mxu0 0.0
    %712 = vmatprep.subr.mxu0 0.0
    %713 = vmatpush2.msra.mxu0 0.0
    %714 = vmatprep.subr.mxu0 0.0
    %715 = vmatpush2.msra.mxu0 0.0
    %716 = vmatprep.subr.mxu0 0.0
    %717 = vmatpush2.msra.mxu0 0.0
    %718 = vmatprep.mubr.f32.mxu0 0.0
    %719 = vmatmul.mubr.f32.gmra.mxu0 %v652
    %v720 = vpop.f32.mrf.mxu0
    %v721 = vadd.f32 0.0, %v720
    %v722 = vpop.f32.mrf.mxu0
    %723 = vdwg.mxu0
    %v724 = vadd.f32 %v651, %v721
    %v725 = vxor.u32 %v724, 2147483648
    %v726 = vmul.f32 %v725, 1.442695
    %v727 = vpow.pop %v726
    %v728 = vadd.f32 %v727, 1.0
    %v729 = vrcp.pop %v728
    %v730 = vmul.f32 1.0, %v729
    %v731 = vtanh.pop %v724
    %v732 = vmul.f32 %v730, %v637
    %734 = vrot.lane.b32.xlu0 %v731, 64
    %v735 = vpop.permute.xlu0 %734
    %v737 = vmul.f32 %v730, %v735
    %739 = vrot.lane.b32.xlu0 %v737, 32
    %v740 = vpop.permute.xlu0 %739
    %v742 = vadd.f32 %v732, %v740
    %v743 = vtanh.pop %v742
    %745 = vrot.lane.b32.xlu0 %v743, 64
    %v746 = vpop.permute.xlu0 %745
    %v748 = vmul.f32 %v730, %v746
    %750 = vrot.lane.b32.xlu0 %v748, 32
    %v751 = vpop.permute.xlu0 %750
    %s753 = scalar_lea.vmem %s2, 12
    %754 = vst.msk [vmem:[%s753] sm:$0x3] %vm123, %v751
    %s755 = scalar_lea.vmem %s0, 14
    %v756 = vld [vmem:[%s755] sm:$0x3]
    %v757 = vsel %vm20, %v751, 0
    %759 = vmatprep.subr.mxu0 0.0
    %760 = vmatpush1.msra.mxu0 0.0
    %761 = vmatprep.subr.mxu0 0.0
    %762 = vmatpush1.msra.mxu0 0.0
    %763 = vmatprep.subr.mxu0 0.0
    %764 = vmatpush1.msra.mxu0 0.0
    %765 = vmatprep.subr.mxu0 0.0
    %766 = vmatpush1.msra.mxu0 0.0
    %767 = vmatprep.subr.mxu0 0.0
    %768 = vmatpush1.msra.mxu0 0.0
    %769 = vmatprep.subr.mxu0 0.0
    %770 = vmatpush1.msra.mxu0 0.0
    %771 = vmatprep.subr.mxu0 0.0
    %772 = vmatpush1.msra.mxu0 0.0
    %773 = vmatprep.subr.mxu0 0.0
    %774 = vmatpush1.msra.mxu0 0.0
    %775 = vmatprep.subr.mxu0 0.0
    %776 = vmatpush1.msra.mxu0 0.0
    %777 = vmatprep.subr.mxu0 0.0
    %778 = vmatpush1.msra.mxu0 0.0
    %779 = vmatprep.subr.mxu0 0.0
    %780 = vmatpush1.msra.mxu0 0.0
    %781 = vmatprep.subr.mxu0 0.0
    %782 = vmatpush1.msra.mxu0 0.0
    %783 = vmatprep.subr.mxu0 0.0
    %784 = vmatpush1.msra.mxu0 %v18
    %785 = vmatprep.subr.mxu0 0.0
    %786 = vmatpush1.msra.mxu0 %v17
    %787 = vmatprep.subr.mxu0 0.0
    %788 = vmatpush1.msra.mxu0 %v16
    %789 = vmatprep.subr.mxu0 0.0
    %790 = vmatpush1.msra.mxu0 %v15
    %791 = vmatprep.subr.mxu0 0.0
    %792 = vmatpush2.msra.mxu0 0.0
    %793 = vmatprep.subr.mxu0 0.0
    %794 = vmatpush2.msra.mxu0 0.0
    %795 = vmatprep.subr.mxu0 0.0
    %796 = vmatpush2.msra.mxu0 0.0
    %797 = vmatprep.subr.mxu0 0.0
    %798 = vmatpush2.msra.mxu0 0.0
    %799 = vmatprep.subr.mxu0 0.0
    %800 = vmatpush2.msra.mxu0 0.0
    %801 = vmatprep.subr.mxu0 0.0
    %802 = vmatpush2.msra.mxu0 0.0
    %803 = vmatprep.subr.mxu0 0.0
    %804 = vmatpush2.msra.mxu0 0.0
    %805 = vmatprep.subr.mxu0 0.0
    %806 = vmatpush2.msra.mxu0 0.0
    %807 = vmatprep.subr.mxu0 0.0
    %808 = vmatpush2.msra.mxu0 0.0
    %809 = vmatprep.subr.mxu0 0.0
    %810 = vmatpush2.msra.mxu0 0.0
    %811 = vmatprep.subr.mxu0 0.0
    %812 = vmatpush2.msra.mxu0 0.0
    %813 = vmatprep.subr.mxu0 0.0
    %814 = vmatpush2.msra.mxu0 0.0
    %815 = vmatprep.subr.mxu0 0.0
    %816 = vmatpush2.msra.mxu0 0.0
    %817 = vmatprep.subr.mxu0 0.0
    %818 = vmatpush2.msra.mxu0 0.0
    %819 = vmatprep.subr.mxu0 0.0
    %820 = vmatpush2.msra.mxu0 0.0
    %821 = vmatprep.subr.mxu0 0.0
    %822 = vmatpush2.msra.mxu0 0.0
    %823 = vmatprep.mubr.f32.mxu0 0.0
    %824 = vmatmul.mubr.f32.gmra.mxu0 %v757
    %v825 = vpop.f32.mrf.mxu0
    %v826 = vadd.f32 0.0, %v825
    %v827 = vpop.f32.mrf.mxu0
    %828 = vdwg.mxu0
    %v829 = vadd.f32 %v756, %v826
    %v830 = vxor.u32 %v829, 2147483648
    %v831 = vmul.f32 %v830, 1.442695
    %v832 = vpow.pop %v831
    %v833 = vadd.f32 %v832, 1.0
    %v834 = vrcp.pop %v833
    %v835 = vmul.f32 1.0, %v834
    %v836 = vtanh.pop %v829
    %v837 = vmul.f32 %v835, %v742
    %839 = vrot.lane.b32.xlu0 %v836, 64
    %v840 = vpop.permute.xlu0 %839
    %v842 = vmul.f32 %v835, %v840
    %844 = vrot.lane.b32.xlu0 %v842, 32
    %v845 = vpop.permute.xlu0 %844
    %v847 = vadd.f32 %v837, %v845
    %v848 = vtanh.pop %v847
    %850 = vrot.lane.b32.xlu0 %v848, 64
    %v851 = vpop.permute.xlu0 %850
    %v853 = vmul.f32 %v835, %v851
    %855 = vrot.lane.b32.xlu0 %v853, 32
    %v856 = vpop.permute.xlu0 %855
    %s858 = scalar_lea.vmem %s2, 14
    %859 = vst.msk [vmem:[%s858] sm:$0x3] %vm123, %v856
    %860 = vst.msk [vmem:[%s3] sm:$0x3] %vm123, %v856
    %862 = vrot.lane.b32.xlu0 %v847, 96
    %v863 = vpop.permute.xlu0 %862
    %865 = vst.msk [vmem:[#allocation2] sm:$0x3] %vm123, %v863
    // Predicated region
    $region10: #{lstm_model_forward.1} parent=1 // pred_check
      _
    $region11: #{lstm_model_forward.1} parent=1 // pred_check_branch
      %867 = sbr.rel (0) target = $region13
    $region12: #{lstm_model_forward.1} parent=1 // pred_region
      _
    $region13: #{lstm_model_forward.1} parent=1 // pred_fallthru
      _
    // Predicated region
    $region14: #{lstm_model_forward.1} parent=1 // pred_check
      _
    $region15: #{lstm_model_forward.1} parent=1 // pred_check_branch
      %869 = sbr.rel (0) target = $region17
    $region16: #{lstm_model_forward.1} parent=1 // pred_region
      _
    $region17: #{lstm_model_forward.1} parent=1 // pred_fallthru
      _
    // Predicated region
    $region18: #{lstm_model_forward.1} parent=1 // pred_check
      _
    $region19: #{lstm_model_forward.1} parent=1 // pred_check_branch
      %871 = sbr.rel (0) target = $region21
    $region20: #{lstm_model_forward.1} parent=1 // pred_region
      %s873 = ssub.s32 32, 32
      %874 = vsyncadd [#allocation3], %s873
      %s876 = sshll.u32 [#allocation2], 4
      %s877 = int_to_ptr.vmem [resolvable:$true] %s876
      %879 = dma.vmem_to_hbm [thread:$0]  %s877, 32, %s4, [#allocation3]
    $region21: #{lstm_model_forward.1} parent=1 // pred_fallthru
      _
    // Predicated region
    $region22: #{lstm_model_forward.1} parent=1 // pred_check
      _
    $region23: #{lstm_model_forward.1} parent=1 // pred_check_branch
      %881 = sbr.rel (0) target = $region25
    $region24: #{lstm_model_forward.1} parent=1 // pred_region
      _
    $region25: #{lstm_model_forward.1} parent=1 // pred_fallthru
      _
    // Predicated region
    $region26: #{lstm_model_forward.1} parent=1 // pred_check
      _
    $region27: #{lstm_model_forward.1} parent=1 // pred_check_branch
      %883 = sbr.rel (0) target = $region29
    $region28: #{lstm_model_forward.1} parent=1 // pred_region
      _
    $region29: #{lstm_model_forward.1} parent=1 // pred_fallthru
      _
    // Predicated region
    $region30: #{lstm_model_forward.1} parent=1 // pred_check
      _
    $region31: #{lstm_model_forward.1} parent=1 // pred_check_branch
      %885 = sbr.rel (0) target = $region33
    $region32: #{lstm_model_forward.1} parent=1 // pred_region
      %886 = dma.done [#allocation3], 32
    $region33: #{lstm_model_forward.1} parent=1 // pred_fallthru
      _
    %887 = vsyncpa [#allocation3], 1

</llo_original>
